<compile_context>
chip_gen: v7x
topology: tpu7x:2x2x1
jax: 0.10.0
libtpu: 0.0.40
codegen_flags: <defaults>
</compile_context>

<pallas_src>
import functools
from typing import NamedTuple

import jax
import jax.numpy as jnp
from jax.experimental import pallas as pl
from jax.experimental.pallas import tpu as pltpu


# ---------------------------------------------------------------------------
# Kernel
# ---------------------------------------------------------------------------
def _mlp_kernel(x_ref, w1_ref, b1_ref, w2_ref, b2_ref, o_ref):
    # Layer 1: x @ W1 (bf16 operands, f32 accumulation) + b1, sigmoid in f32.
    x = x_ref[...].astype(jnp.bfloat16)
    z1 = jnp.dot(x, w1_ref[...], preferred_element_type=jnp.float32) + b1_ref[...]
    h = pl.reciprocal(1.0 + jnp.exp(-z1), approx=True)        # sigmoid on EUP
    # Layer 2: h @ W2 (bf16 operands, f32 accumulation) + b2, sigmoid in f32.
    z2 = jnp.dot(h.astype(jnp.bfloat16), w2_ref[...],
                 preferred_element_type=jnp.float32) + b2_ref[...]
    o_ref[...] = pl.reciprocal(1.0 + jnp.exp(-z2), approx=True).astype(o_ref.dtype)


# ---------------------------------------------------------------------------
# Parameter preparation (done once, NOT per forward call)
# ---------------------------------------------------------------------------
def _round_up(x, m):
    return (x + m - 1) // m * m


def _cdiv(a, b):
    return -(-a // b)


@functools.lru_cache(maxsize=1)
def _prefers_256_mxu():
    """True on 256-wide-MXU parts (v6e/v7x); False on v5e and older."""
    try:
        kind = jax.devices()[0].device_kind.lower()
    except Exception:
        return False
    return not any(v in kind for v in ("v2", "v3", "v4", "v5"))


def _pad_feature(n):
    if n > 128 and _prefers_256_mxu():
        return _round_up(n, 256)
    return _round_up(n, 128)


class NetParams(NamedTuple):
    w1p: jax.Array  # (IN_P, HID_P)  bf16
    b1p: jax.Array  # (1, HID_P)     f32
    w2p: jax.Array  # (HID_P, OUT_P) bf16
    b2p: jax.Array  # (1, OUT_P)     f32
    in_size: int
    hidden_size: int
    output_size: int


def prepare_net_params(w1, b1, w2, b2):
    """Pad to lane-aligned shapes and cast matmul operands to bf16, once.

    w1: (in, hid), b1: (1, hid) or (hid,), w2: (hid, out), b2: (1, out) or (out,)
    (weights stored transposed vs. PyTorch's (out, in) layout).
    Zero-padding keeps the math exact: padded x cols / padded W2 rows are zero.
    """
    in_size, hid = w1.shape
    out = w2.shape[1]
    in_p = _round_up(in_size, 128)
    hid_p = _pad_feature(hid)
    out_p = _pad_feature(out)

    w1p = jnp.zeros((in_p, hid_p), jnp.bfloat16).at[:in_size, :hid].set(
        w1.astype(jnp.bfloat16))
    b1p = jnp.zeros((1, hid_p), jnp.float32).at[:, :hid].set(
        jnp.reshape(b1, (1, hid)).astype(jnp.float32))
    w2p = jnp.zeros((hid_p, out_p), jnp.bfloat16).at[:hid, :out].set(
        w2.astype(jnp.bfloat16))
    b2p = jnp.zeros((1, out_p), jnp.float32).at[:, :out].set(
        jnp.reshape(b2, (1, out)).astype(jnp.float32))
    return NetParams(w1p, b1p, w2p, b2p, in_size, hid, out)


# ---------------------------------------------------------------------------
# Batch tiling / VMEM budgeting
# ---------------------------------------------------------------------------
_VMEM_TILE_BUDGET = 32 * 1024 * 1024  # conservative across v5e / v6e / v7x


def _derive_batch_tiling(batch, in_p, hid_p, out_p, weight_bytes):
    """Pick (TILE_B, B_P, vmem_limit_bytes) from a VMEM budget."""
    b16 = _round_up(batch, 16)  # bf16 packs 16 rows per vreg
    per_row = (2 * in_p * 4      # x tile, f32, double-buffered (worst case)
               + 2 * out_p * 4   # out tile, f32, double-buffered
               + in_p * 2        # in-kernel bf16 copy of x
               + hid_p * 6       # hidden activations (f32 + bf16)
               + out_p * 4)      # second-layer pre-activation
    avail = max(_VMEM_TILE_BUDGET - 2 * weight_bytes - (4 << 20), per_row * 16)
    tile_b_max = max(16, (avail // per_row) // 16 * 16)

    n_steps = _cdiv(b16, tile_b_max)
    if b16 >= 32:
        # >=2 grid steps lets the "parallel" batch axis shard over v7x's 2 TCs.
        n_steps = max(n_steps, 2)
    tile_b = _round_up(_cdiv(b16, n_steps), 16)
    b_p = tile_b * n_steps

    # Explicit scoped-VMEM limit (conservatively assume double-buffered weights).
    footprint = 2 * weight_bytes + tile_b * per_row
    vmem_limit = int(min(max(footprint * 3 // 2 + (2 << 20), 16 << 20), 56 << 20))
    return tile_b, b_p, vmem_limit


# ---------------------------------------------------------------------------
# Forward pass
# ---------------------------------------------------------------------------
def net_forward(x, params: NetParams):
    """sigmoid(linear2(sigmoid(linear1(x)))) with pre-prepared params.

    x: (B, input_size) float32 -> (B, output_size) float32.
    """
    batch, in_size = x.shape
    assert in_size == params.in_size
    in_p, hid_p = params.w1p.shape
    out_p = params.w2p.shape[1]
    out = params.output_size

    weight_bytes = (int(params.w1p.size) * 2 + int(params.w2p.size) * 2
                    + int(params.b1p.size) * 4 + int(params.b2p.size) * 4)
    tile_b, b_p, vmem_limit = _derive_batch_tiling(
        batch, in_p, hid_p, out_p, weight_bytes)

    # Only materialize a padded copy of x when the shape is actually ragged.
    if b_p == batch and in_p == in_size:
        xp = x  # no extra HBM pass; kernel casts to bf16 on the fly
    else:
        xp = jnp.zeros((b_p, in_p), jnp.bfloat16).at[:batch, :in_size].set(
            x.astype(jnp.bfloat16))

    grid = (b_p // tile_b,)

    cost = pl.CostEstimate(
        flops=2 * b_p * (in_p * hid_p + hid_p * out_p),
        transcendentals=2 * b_p * (hid_p + out_p),
        bytes_accessed=(int(xp.size) * xp.dtype.itemsize
                        + weight_bytes + b_p * out_p * 4),
    )

    def call(single_buffer_weights):
        # Resident (constant-index) operands: weights + biases stay in VMEM
        # across the whole batch grid; single-buffer them to halve their VMEM.
        resident = ({"pipeline_mode": pl.Buffered(1)}
                    if single_buffer_weights else {})
        return pl.pallas_call(
            _mlp_kernel,
            out_shape=jax.ShapeDtypeStruct((b_p, out_p), jnp.float32),
            grid_spec=pltpu.PrefetchScalarGridSpec(
                num_scalar_prefetch=0,
                grid=grid,
                in_specs=[
                    pl.BlockSpec((tile_b, in_p), lambda i: (i, 0)),           # x: streamed
                    pl.BlockSpec((in_p, hid_p), lambda i: (0, 0), **resident),  # W1
                    pl.BlockSpec((1, hid_p), lambda i: (0, 0), **resident),     # b1
                    pl.BlockSpec((hid_p, out_p), lambda i: (0, 0), **resident), # W2
                    pl.BlockSpec((1, out_p), lambda i: (0, 0), **resident),     # b2
                ],
                out_specs=pl.BlockSpec((tile_b, out_p), lambda i: (i, 0)),
            ),
            compiler_params=pltpu.CompilerParams(
                dimension_semantics=("parallel",),
                vmem_limit_bytes=vmem_limit,
            ),
            cost_estimate=cost,
        )(xp, params.w1p, params.b1p, params.w2p, params.b2p)

    # Prefer single-buffered resident weights; fall back to the default
    # double-buffering if this Pallas build rejects buffer_count=1.
    # (Probe is done eagerly; wrap net_forward in jit only around a path that
    # is known to compile.)
    try:
        out_padded = call(single_buffer_weights=True)
        jax.block_until_ready(out_padded)
    except Exception:
        out_padded = call(single_buffer_weights=False)

    if b_p == batch and out_p == out:
        return out_padded
    return out_padded[:batch, :out]


# ---------------------------------------------------------------------------
# Init mimicking nn.Linear's U(-1/sqrt(fan_in), 1/sqrt(fan_in))
# ---------------------------------------------------------------------------
def init_params(key, input_size, hidden_size, output_size):
    k1, k2, k3, k4 = jax.random.split(key, 4)
    bound1 = 1.0 / jnp.sqrt(input_size)
    bound2 = 1.0 / jnp.sqrt(hidden_size)
    # Stored directly in (in, out) layout for the kernel.
    w1 = jax.random.uniform(k1, (input_size, hidden_size), jnp.float32, -bound1, bound1)
    b1 = jax.random.uniform(k2, (1, hidden_size), jnp.float32, -bound1, bound1)
    w2 = jax.random.uniform(k3, (hidden_size, output_size), jnp.float32, -bound2, bound2)
    b2 = jax.random.uniform(k4, (1, output_size), jnp.float32, -bound2, bound2)
    return w1, b1, w2, b2


if __name__ == "__main__":
    key = jax.random.PRNGKey(0)
    kx, kp = jax.random.split(key)

    batch, input_size, hidden_size, output_size = 64, 16, 32, 8

    x = jax.random.normal(kx, (batch, input_size), jnp.float32)
    w1, b1, w2, b2 = init_params(kp, input_size, hidden_size, output_size)

    # One-time padding / bf16 casting of the weights (hoisted out of forward).
    params = prepare_net_params(w1, b1, w2, b2)

    out = net_forward(x, params)
    jax.block_until_ready(out)
    assert out.shape == (batch, output_size)

    # Reference matching the kernel's bf16-operand / f32-accumulate matmuls
    # (tolerance covers the approx-reciprocal sigmoid epilogue).
    xb, w1b, w2b = (a.astype(jnp.bfloat16) for a in (x, w1, w2))
    h_ref = jax.nn.sigmoid(
        jnp.dot(xb, w1b, preferred_element_type=jnp.float32) + b1)
    ref_bf16 = jax.nn.sigmoid(
        jnp.dot(h_ref.astype(jnp.bfloat16), w2b,
                preferred_element_type=jnp.float32) + b2)
    assert jnp.allclose(out, ref_bf16, atol=1e-2, rtol=1e-2)

    # Pure-f32 reference (bf16 operand rounding + approx reciprocal only).
    ref_f32 = jax.nn.sigmoid(jax.nn.sigmoid(x @ w1 + b1) @ w2 + b2)
    assert jnp.allclose(out, ref_f32, atol=3e-2, rtol=3e-2)

    print("KERNEL_OK")
</pallas_src>

<mosaic_0001>
module attributes {stable_mosaic.version = 11 : i64} {
  func.func @_mlp_kernel(%arg0: i32, %arg1: memref<32x128xbf16, #tpu.memory_space<vmem>>, %arg2: memref<128x128xbf16, #tpu.memory_space<vmem>>, %arg3: memref<1x128xf32, #tpu.memory_space<vmem>>, %arg4: memref<128x128xbf16, #tpu.memory_space<vmem>>, %arg5: memref<1x128xf32, #tpu.memory_space<vmem>>, %arg6: memref<32x128xf32, #tpu.memory_space<vmem>>) attributes {dimension_semantics = [#tpu.dimension_semantics<parallel>], iteration_bounds = array<i64: 2>, scalar_prefetch = 0 : i64, scratch_operands = 0 : i64, tpu.core_type = #tpu.core_type<tc>, window_params = [{transform_indices = @transform_0, window_bounds = array<i64: 32, 128>}, {pipeline_mode = #tpu.pipeline_mode<synchronous>, transform_indices = @transform_1, window_bounds = array<i64: 128, 128>}, {pipeline_mode = #tpu.pipeline_mode<synchronous>, transform_indices = @transform_2, window_bounds = array<i64: 1, 128>}, {pipeline_mode = #tpu.pipeline_mode<synchronous>, transform_indices = @transform_3, window_bounds = array<i64: 128, 128>}, {pipeline_mode = #tpu.pipeline_mode<synchronous>, transform_indices = @transform_4, window_bounds = array<i64: 1, 128>}, {transform_indices = @transform_5, window_bounds = array<i64: 32, 128>}]} {
    %c0 = arith.constant 0 : index
    %c0_0 = arith.constant 0 : index
    %0 = vector.load %arg1[%c0, %c0_0] : memref<32x128xbf16, #tpu.memory_space<vmem>>, vector<32x128xbf16>
    %c0_1 = arith.constant 0 : index
    %c0_2 = arith.constant 0 : index
    %1 = vector.load %arg2[%c0_1, %c0_2] : memref<128x128xbf16, #tpu.memory_space<vmem>>, vector<128x128xbf16>
    %cst = arith.constant dense<0.000000e+00> : vector<32x128xf32>
    %2 = tpu.matmul %0, %1, %cst {dimension_numbers = #tpu.dot_dimension_numbers<[1], [0], [0], [1], [0, 0, 1, 1], [], []>} : vector<32x128xbf16>, vector<128x128xbf16>, vector<32x128xf32> -> vector<32x128xf32>
    %c0_3 = arith.constant 0 : index
    %c0_4 = arith.constant 0 : index
    %3 = vector.load %arg3[%c0_3, %c0_4] : memref<1x128xf32, #tpu.memory_space<vmem>>, vector<1x128xf32>
    %4 = vector.broadcast %3 : vector<1x128xf32> to vector<32x128xf32>
    %5 = arith.addf %2, %4 : vector<32x128xf32>
    %cst_5 = arith.constant 0.000000e+00 : f32
    %6 = vector.broadcast %cst_5 : f32 to vector<32x128xf32>
    %7 = arith.subf %6, %5 : vector<32x128xf32>
    %8 = math.exp %7 : vector<32x128xf32>
    %cst_6 = arith.constant 1.000000e+00 : f32
    %9 = vector.broadcast %cst_6 : f32 to vector<32x128xf32>
    %10 = arith.addf %9, %8 : vector<32x128xf32>
    %11 = tpu.reciprocal %10 {approx = true} : vector<32x128xf32> -> vector<32x128xf32>
    %12 = arith.truncf %11 : vector<32x128xf32> to vector<32x128xbf16>
    %c0_7 = arith.constant 0 : index
    %c0_8 = arith.constant 0 : index
    %13 = vector.load %arg4[%c0_7, %c0_8] : memref<128x128xbf16, #tpu.memory_space<vmem>>, vector<128x128xbf16>
    %cst_9 = arith.constant dense<0.000000e+00> : vector<32x128xf32>
    %14 = tpu.matmul %12, %13, %cst_9 {dimension_numbers = #tpu.dot_dimension_numbers<[1], [0], [0], [1], [0, 0, 1, 1], [], []>} : vector<32x128xbf16>, vector<128x128xbf16>, vector<32x128xf32> -> vector<32x128xf32>
    %c0_10 = arith.constant 0 : index
    %c0_11 = arith.constant 0 : index
    %15 = vector.load %arg5[%c0_10, %c0_11] : memref<1x128xf32, #tpu.memory_space<vmem>>, vector<1x128xf32>
    %16 = vector.broadcast %15 : vector<1x128xf32> to vector<32x128xf32>
    %17 = arith.addf %14, %16 : vector<32x128xf32>
    %cst_12 = arith.constant 0.000000e+00 : f32
    %18 = vector.broadcast %cst_12 : f32 to vector<32x128xf32>
    %19 = arith.subf %18, %17 : vector<32x128xf32>
    %20 = math.exp %19 : vector<32x128xf32>
    %cst_13 = arith.constant 1.000000e+00 : f32
    %21 = vector.broadcast %cst_13 : f32 to vector<32x128xf32>
    %22 = arith.addf %21, %20 : vector<32x128xf32>
    %23 = tpu.reciprocal %22 {approx = true} : vector<32x128xf32> -> vector<32x128xf32>
    %c0_14 = arith.constant 0 : index
    %c0_15 = arith.constant 0 : index
    %24 = vector.load %arg6[%c0_14, %c0_15] : memref<32x128xf32, #tpu.memory_space<vmem>>, vector<32x128xf32>
    tpu.vector_store %arg6[%c0_14, %c0_15], %23 {strides = array<i32>} : memref<32x128xf32, #tpu.memory_space<vmem>>, vector<32x128xf32>,
    return
  }
  func.func @transform_0(%arg0: i32) -> (i32, i32) {
    %c0_i32 = arith.constant 0 : i32
    %c0_i32_0 = arith.constant 0 : i32
    return %arg0, %c0_i32 : i32, i32
  }
  func.func @transform_1(%arg0: i32) -> (i32, i32) {
    %c0_i32 = arith.constant 0 : i32
    %c0_i32_0 = arith.constant 0 : i32
    %c0_i32_1 = arith.constant 0 : i32
    return %c0_i32, %c0_i32_0 : i32, i32
  }
  func.func @transform_2(%arg0: i32) -> (i32, i32) {
    %c0_i32 = arith.constant 0 : i32
    %c0_i32_0 = arith.constant 0 : i32
    %c0_i32_1 = arith.constant 0 : i32
    return %c0_i32, %c0_i32_0 : i32, i32
  }
  func.func @transform_3(%arg0: i32) -> (i32, i32) {
    %c0_i32 = arith.constant 0 : i32
    %c0_i32_0 = arith.constant 0 : i32
    %c0_i32_1 = arith.constant 0 : i32
    return %c0_i32, %c0_i32_0 : i32, i32
  }
  func.func @transform_4(%arg0: i32) -> (i32, i32) {
    %c0_i32 = arith.constant 0 : i32
    %c0_i32_0 = arith.constant 0 : i32
    %c0_i32_1 = arith.constant 0 : i32
    return %c0_i32, %c0_i32_0 : i32, i32
  }
  func.func @transform_5(%arg0: i32) -> (i32, i32) {
    %c0_i32 = arith.constant 0 : i32
    %c0_i32_0 = arith.constant 0 : i32
    return %arg0, %c0_i32 : i32, i32
  }
}

module attributes {stable_mosaic.version = 11 : i64} {
  func.func @_mlp_kernel(%arg0: i32, %arg1: memref<32x128xbf16, #tpu.memory_space<vmem>>, %arg2: memref<128x128xbf16, #tpu.memory_space<vmem>>, %arg3: memref<1x128xf32, #tpu.memory_space<vmem>>, %arg4: memref<128x128xbf16, #tpu.memory_space<vmem>>, %arg5: memref<1x128xf32, #tpu.memory_space<vmem>>, %arg6: memref<32x128xf32, #tpu.memory_space<vmem>>) attributes {dimension_semantics = [#tpu.dimension_semantics<parallel>], iteration_bounds = array<i64: 2>, scalar_prefetch = 0 : i64, scratch_operands = 0 : i64, tpu.core_type = #tpu.core_type<tc>, window_params = [{transform_indices = @transform_0, window_bounds = array<i64: 32, 128>}, {pipeline_mode = #tpu.pipeline_mode<synchronous>, transform_indices = @transform_1, window_bounds = array<i64: 128, 128>}, {pipeline_mode = #tpu.pipeline_mode<synchronous>, transform_indices = @transform_2, window_bounds = array<i64: 1, 128>}, {pipeline_mode = #tpu.pipeline_mode<synchronous>, transform_indices = @transform_3, window_bounds = array<i64: 128, 128>}, {pipeline_mode = #tpu.pipeline_mode<synchronous>, transform_indices = @transform_4, window_bounds = array<i64: 1, 128>}, {transform_indices = @transform_5, window_bounds = array<i64: 32, 128>}]} {
    %c0 = arith.constant 0 : index
    %c0_0 = arith.constant 0 : index
    %0 = vector.load %arg1[%c0, %c0_0] : memref<32x128xbf16, #tpu.memory_space<vmem>>, vector<32x128xbf16>
    %c0_1 = arith.constant 0 : index
    %c0_2 = arith.constant 0 : index
    %1 = vector.load %arg2[%c0_1, %c0_2] : memref<128x128xbf16, #tpu.memory_space<vmem>>, vector<128x128xbf16>
    %cst = arith.constant dense<0.000000e+00> : vector<32x128xf32>
    %2 = tpu.matmul %0, %1, %cst {dimension_numbers = #tpu.dot_dimension_numbers<[1], [0], [0], [1], [0, 0, 1, 1], [], []>} : vector<32x128xbf16>, vector<128x128xbf16>, vector<32x128xf32> -> vector<32x128xf32>
    %c0_3 = arith.constant 0 : index
    %c0_4 = arith.constant 0 : index
    %3 = vector.load %arg3[%c0_3, %c0_4] : memref<1x128xf32, #tpu.memory_space<vmem>>, vector<1x128xf32>
    %4 = vector.broadcast %3 : vector<1x128xf32> to vector<32x128xf32>
    %5 = arith.addf %2, %4 : vector<32x128xf32>
    %cst_5 = arith.constant 0.000000e+00 : f32
    %6 = vector.broadcast %cst_5 : f32 to vector<32x128xf32>
    %7 = arith.subf %6, %5 : vector<32x128xf32>
    %8 = math.exp %7 : vector<32x128xf32>
    %cst_6 = arith.constant 1.000000e+00 : f32
    %9 = vector.broadcast %cst_6 : f32 to vector<32x128xf32>
    %10 = arith.addf %9, %8 : vector<32x128xf32>
    %11 = tpu.reciprocal %10 {approx = true} : vector<32x128xf32> -> vector<32x128xf32>
    %12 = arith.truncf %11 : vector<32x128xf32> to vector<32x128xbf16>
    %c0_7 = arith.constant 0 : index
    %c0_8 = arith.constant 0 : index
    %13 = vector.load %arg4[%c0_7, %c0_8] : memref<128x128xbf16, #tpu.memory_space<vmem>>, vector<128x128xbf16>
    %cst_9 = arith.constant dense<0.000000e+00> : vector<32x128xf32>
    %14 = tpu.matmul %12, %13, %cst_9 {dimension_numbers = #tpu.dot_dimension_numbers<[1], [0], [0], [1], [0, 0, 1, 1], [], []>} : vector<32x128xbf16>, vector<128x128xbf16>, vector<32x128xf32> -> vector<32x128xf32>
    %c0_10 = arith.constant 0 : index
    %c0_11 = arith.constant 0 : index
    %15 = vector.load %arg5[%c0_10, %c0_11] : memref<1x128xf32, #tpu.memory_space<vmem>>, vector<1x128xf32>
    %16 = vector.broadcast %15 : vector<1x128xf32> to vector<32x128xf32>
    %17 = arith.addf %14, %16 : vector<32x128xf32>
    %cst_12 = arith.constant 0.000000e+00 : f32
    %18 = vector.broadcast %cst_12 : f32 to vector<32x128xf32>
    %19 = arith.subf %18, %17 : vector<32x128xf32>
    %20 = math.exp %19 : vector<32x128xf32>
    %cst_13 = arith.constant 1.000000e+00 : f32
    %21 = vector.broadcast %cst_13 : f32 to vector<32x128xf32>
    %22 = arith.addf %21, %20 : vector<32x128xf32>
    %23 = tpu.reciprocal %22 {approx = true} : vector<32x128xf32> -> vector<32x128xf32>
    %c0_14 = arith.constant 0 : index
    %c0_15 = arith.constant 0 : index
    %24 = vector.load %arg6[%c0_14, %c0_15] : memref<32x128xf32, #tpu.memory_space<vmem>>, vector<32x128xf32>
    tpu.vector_store %arg6[%c0_14, %c0_15], %23 {strides = array<i32>} : memref<32x128xf32, #tpu.memory_space<vmem>>, vector<32x128xf32>,
    return
  }
  func.func @transform_0(%arg0: i32) -> (i32, i32) {
    %c0_i32 = arith.constant 0 : i32
    %c0_i32_0 = arith.constant 0 : i32
    return %arg0, %c0_i32 : i32, i32
  }
  func.func @transform_1(%arg0: i32) -> (i32, i32) {
    %c0_i32 = arith.constant 0 : i32
    %c0_i32_0 = arith.constant 0 : i32
    %c0_i32_1 = arith.constant 0 : i32
    return %c0_i32, %c0_i32_0 : i32, i32
  }
  func.func @transform_2(%arg0: i32) -> (i32, i32) {
    %c0_i32 = arith.constant 0 : i32
    %c0_i32_0 = arith.constant 0 : i32
    %c0_i32_1 = arith.constant 0 : i32
    return %c0_i32, %c0_i32_0 : i32, i32
  }
  func.func @transform_3(%arg0: i32) -> (i32, i32) {
    %c0_i32 = arith.constant 0 : i32
    %c0_i32_0 = arith.constant 0 : i32
    %c0_i32_1 = arith.constant 0 : i32
    return %c0_i32, %c0_i32_0 : i32, i32
  }
  func.func @transform_4(%arg0: i32) -> (i32, i32) {
    %c0_i32 = arith.constant 0 : i32
    %c0_i32_0 = arith.constant 0 : i32
    %c0_i32_1 = arith.constant 0 : i32
    return %c0_i32, %c0_i32_0 : i32, i32
  }
  func.func @transform_5(%arg0: i32) -> (i32, i32) {
    %c0_i32 = arith.constant 0 : i32
    %c0_i32_0 = arith.constant 0 : i32
    return %arg0, %c0_i32 : i32, i32
  }
}

</mosaic_0001>

<llo_original>
// kernel: tpu_custom_call.1
$region0: #{tpu_custom_call.1}
  #allocation0 [shape = 'u32[]', space=smem, size = 0x4, offset = 0x4, fixed_abs, tag = 'smem constant byte address 0x4 - core index']
  #allocation1 [shape = 'u32[144,128]{1,0:T(1,128)}', space=vmem, size = 0x12000, scoped, tag = 'internal scratch']
  %s0 = inlined_call_operand.hbm [shape: bf16[64,128], index: 0, kind: input, shape index: {}]
  %s1 = inlined_call_operand.hbm [shape: bf16[128,128], index: 1, kind: input, shape index: {}]
  %s2 = inlined_call_operand.vmem [shape: f32[1,128], index: 2, kind: input, shape index: {}]
  %s3 = inlined_call_operand.hbm [shape: bf16[128,128], index: 3, kind: input, shape index: {}]
  %s4 = inlined_call_operand.vmem [shape: f32[1,128], index: 4, kind: input, shape index: {}]
  %s5 = inlined_call_operand.hbm [shape: f32[64,128], index: 5, kind: output, shape index: {}]
  %s6 = sld [smem:[#allocation0]]
  $region65: #{tpu_custom_call.1} parent=0
    _
  %s8 = ssub.s32 1, %s6
  %s9 = scalar_select 0, %s8, %s6
  $region1: #{tpu_custom_call.1} parent=0
    #allocation2 [shape = 'u8[16384]{0}', space=vmem, size = 0x4000, scoped, tag = 'input window, operand 0']
    #allocation3 [shape = 's32[2]{0}', space=sflag, size = 0x8, scoped, tag = 'scoped memory for tpu_custom_call.1']
    #allocation4 [shape = 's32[2]{0}', space=sflag, size = 0x8, scoped, tag = 'scoped memory for tpu_custom_call.1']
    #allocation5 [shape = 'u8[32768]{0}', space=vmem, size = 0x8000, scoped, tag = 'input window, operand 1, single buffered']
    #allocation6 [shape = 's32[1]{0}', space=sflag, size = 0x4, scoped, tag = 'scoped memory for tpu_custom_call.1']
    #allocation7 [shape = 'u8[32768]{0}', space=vmem, size = 0x8000, scoped, tag = 'input window, operand 3, single buffered']
    #allocation8 [shape = 'u8[32768]{0}', space=vmem, size = 0x8000, scoped, tag = 'output window, operand 0']
    %10 = vsyncpa [#allocation3], 0
    %s11 = scalar_lea.sflag [#allocation3], 1
    %12 = vsyncpa %s11, 0
    %13 = vsyncpa [#allocation6], 0
    %14 = vsyncpa [#allocation4], 0
    %s15 = scalar_lea.sflag [#allocation4], 1
    %16 = vsyncpa %s15, 0
    loop: start=0, step=1, limit=4
    $region2: #{tpu_custom_call.1} parent=1 // loop_pre_header
      _
    $region3: #{tpu_custom_call.1} parent=1 // loop_header
      %s18 = sphi 0, %s22
      %p19 = scmp.ge.s32.totalorder %s18, 4
      %s28 = sphi 0, %s30
      %s31 = sphi 0, %s28
      %s32 = sphi 0, %s31
      %s48 = sphi 0, %s32
      %s52 = sphi 0, %s52
      %s54 = sphi 0, %s52
      %s55 = sphi 0, %s54
      %s69 = sphi 0, %s55
      %s73 = sphi 0, %s73
      %s75 = sphi 0, %s73
      %s76 = sphi 0, %s75
      %s90 = sphi 0, %s76
      %s94 = sphi 0, %s94
      %s96 = sphi 0, %s94
      %s97 = sphi 0, %s96
      %s111 = sphi 0, %s97
      %s115 = sphi 0, %s115
      %s117 = sphi 0, %s115
      %s118 = sphi 0, %s117
      %s132 = sphi 0, %s118
      %s138 = sphi 0, %s140
      %s141 = sphi 0, %s138
      %s142 = sphi 0, %s141
      %s158 = sphi 0, %s142
    $region4: #{tpu_custom_call.1} parent=1 // loop_header_branch
      %21 = sbr.rel (%p19) target = $region8
    $region5: #{tpu_custom_call.1} parent=1 // loop_body
      %s23 = ssub.s32 %s18, 1
      %s24 = ssub.s32 %s18, 2
      %s25 = sadd.s32 %s18, 1
      %s26 = ssub.s32 %s18, %s25
      %p27 = scmp.eq.s32.totalorder %s26, 0
      %s29 = sadd.s32 %s28, 1
      %s30 = scalar_select %p27, %s28, %s29
      %p33 = pneg %p27
      %p34 = scmp.eq.s32.totalorder %s18, 1
      %p35 = por %p33, %p34
      %p36 = scmp.ne.s32.totalorder %s28, %s31
      %p37 = scmp.eq.s32.totalorder %s18, 0
      %p38 = por %p36, %p37
      %p39 = scmp.ne.s32.totalorder %s28, %s31
      %p40 = scmp.eq.s32.totalorder %s23, 1
      %p41 = por %p39, %p40
      %p42 = scmp.ne.s32.totalorder %s31, %s32
      %p43 = scmp.eq.s32.totalorder %s23, 0
      %p44 = por %p42, %p43
      %p45 = scmp.ne.s32.totalorder %s31, %s32
      %p46 = scmp.eq.s32.totalorder %s24, 1
      %p47 = por %p45, %p46
      %p49 = scmp.ne.s32.totalorder %s32, %s48
      %p50 = scmp.eq.s32.totalorder %s24, 0
      %p51 = por %p49, %p50
      %s53 = sadd.s32 %s52, 1
      %p56 = scmp.eq.s32.totalorder %s18, 1
      %p57 = scmp.ne.s32.totalorder %s52, %s54
      %p58 = scmp.eq.s32.totalorder %s18, 0
      %p59 = por %p57, %p58
      %p60 = scmp.ne.s32.totalorder %s52, %s54
      %p61 = scmp.eq.s32.totalorder %s23, 1
      %p62 = por %p60, %p61
      %p63 = scmp.ne.s32.totalorder %s54, %s55
      %p64 = scmp.eq.s32.totalorder %s23, 0
      %p65 = por %p63, %p64
      %p66 = scmp.ne.s32.totalorder %s54, %s55
      %p67 = scmp.eq.s32.totalorder %s24, 1
      %p68 = por %p66, %p67
      %p70 = scmp.ne.s32.totalorder %s55, %s69
      %p71 = scmp.eq.s32.totalorder %s24, 0
      %p72 = por %p70, %p71
      %s74 = sadd.s32 %s73, 1
      %p77 = scmp.eq.s32.totalorder %s18, 1
      %p78 = scmp.ne.s32.totalorder %s73, %s75
      %p79 = scmp.eq.s32.totalorder %s18, 0
      %p80 = por %p78, %p79
      %p81 = scmp.ne.s32.totalorder %s73, %s75
      %p82 = scmp.eq.s32.totalorder %s23, 1
      %p83 = por %p81, %p82
      %p84 = scmp.ne.s32.totalorder %s75, %s76
      %p85 = scmp.eq.s32.totalorder %s23, 0
      %p86 = por %p84, %p85
      %p87 = scmp.ne.s32.totalorder %s75, %s76
      %p88 = scmp.eq.s32.totalorder %s24, 1
      %p89 = por %p87, %p88
      %p91 = scmp.ne.s32.totalorder %s76, %s90
      %p92 = scmp.eq.s32.totalorder %s24, 0
      %p93 = por %p91, %p92
      %s95 = sadd.s32 %s94, 1
      %p98 = scmp.eq.s32.totalorder %s18, 1
      %p99 = scmp.ne.s32.totalorder %s94, %s96
      %p100 = scmp.eq.s32.totalorder %s18, 0
      %p101 = por %p99, %p100
      %p102 = scmp.ne.s32.totalorder %s94, %s96
      %p103 = scmp.eq.s32.totalorder %s23, 1
      %p104 = por %p102, %p103
      %p105 = scmp.ne.s32.totalorder %s96, %s97
      %p106 = scmp.eq.s32.totalorder %s23, 0
      %p107 = por %p105, %p106
      %p108 = scmp.ne.s32.totalorder %s96, %s97
      %p109 = scmp.eq.s32.totalorder %s24, 1
      %p110 = por %p108, %p109
      %p112 = scmp.ne.s32.totalorder %s97, %s111
      %p113 = scmp.eq.s32.totalorder %s24, 0
      %p114 = por %p112, %p113
      %s116 = sadd.s32 %s115, 1
      %p119 = scmp.eq.s32.totalorder %s18, 1
      %p120 = scmp.ne.s32.totalorder %s115, %s117
      %p121 = scmp.eq.s32.totalorder %s18, 0
      %p122 = por %p120, %p121
      %p123 = scmp.ne.s32.totalorder %s115, %s117
      %p124 = scmp.eq.s32.totalorder %s23, 1
      %p125 = por %p123, %p124
      %p126 = scmp.ne.s32.totalorder %s117, %s118
      %p127 = scmp.eq.s32.totalorder %s23, 0
      %p128 = por %p126, %p127
      %p129 = scmp.ne.s32.totalorder %s117, %s118
      %p130 = scmp.eq.s32.totalorder %s24, 1
      %p131 = por %p129, %p130
      %p133 = scmp.ne.s32.totalorder %s118, %s132
      %p134 = scmp.eq.s32.totalorder %s24, 0
      %p135 = por %p133, %p134
      %s136 = ssub.s32 %s18, %s25
      %p137 = scmp.eq.s32.totalorder %s136, 0
      %s139 = sadd.s32 %s138, 1
      %s140 = scalar_select %p137, %s138, %s139
      %p143 = pneg %p137
      %p144 = scmp.eq.s32.totalorder %s18, 1
      %p145 = por %p143, %p144
      %p146 = scmp.ne.s32.totalorder %s138, %s141
      %p147 = scmp.eq.s32.totalorder %s18, 0
      %p148 = por %p146, %p147
      %p149 = scmp.ne.s32.totalorder %s138, %s141
      %p150 = scmp.eq.s32.totalorder %s23, 1
      %p151 = por %p149, %p150
      %p152 = scmp.ne.s32.totalorder %s141, %s142
      %p153 = scmp.eq.s32.totalorder %s23, 0
      %p154 = por %p152, %p153
      %p155 = scmp.ne.s32.totalorder %s141, %s142
      %p156 = scmp.eq.s32.totalorder %s24, 1
      %p157 = por %p155, %p156
      %p159 = scmp.ne.s32.totalorder %s142, %s158
      %p160 = scmp.eq.s32.totalorder %s24, 0
      %p161 = por %p159, %p160
      %p162 = scmp.le.s32.totalorder 1, %s18
      %p163 = scmp.lt.s32.totalorder %s18, 3
      %p164 = pnand %p162, %p163
      %p165 = pneg %p164
      // Predicated region
      $region9: #{tpu_custom_call.1} parent=5 // pred_check
        _
      $region10: #{tpu_custom_call.1} parent=5 // pred_check_branch
        %167 = sbr.rel (%p164) target = $region12
      $region11: #{tpu_custom_call.1} parent=5 // pred_region
        %s168 = ssub.s32 %s18, 1
        // Predicated region
        $region13: #{tpu_custom_call.1} parent=11 // pred_check
          %p169 = pneg %p65
        $region14: #{tpu_custom_call.1} parent=11 // pred_check_branch
          %171 = sbr.rel (%p169) target = $region16
        $region15: #{tpu_custom_call.1} parent=11 // pred_region
          %s173 = ssub.s32 1024, 1024
          %174 = vsyncadd [#allocation6], %s173
          %s175 = sshll.u32 [#allocation5], 4
          %s176 = int_to_ptr.vmem [resolvable:$true] %s175
          %181 = dma.hbm_to_vmem [thread:$0]  %s1, 1024, %s176, [#allocation6], 64, 64, 4
        $region16: #{tpu_custom_call.1} parent=11 // pred_fallthru
          _
        // Predicated region
        $region17: #{tpu_custom_call.1} parent=11 // pred_check
          %p182 = pneg %p86
        $region18: #{tpu_custom_call.1} parent=11 // pred_check_branch
          %184 = sbr.rel (%p182) target = $region20
        $region19: #{tpu_custom_call.1} parent=11 // pred_region
          _
        $region20: #{tpu_custom_call.1} parent=11 // pred_fallthru
          _
        // Predicated region
        $region21: #{tpu_custom_call.1} parent=11 // pred_check
          %p185 = pneg %p107
        $region22: #{tpu_custom_call.1} parent=11 // pred_check_branch
          %187 = sbr.rel (%p185) target = $region24
        $region23: #{tpu_custom_call.1} parent=11 // pred_region
          %s189 = ssub.s32 1024, 1024
          %190 = vsyncadd [#allocation6], %s189
          %s191 = sshll.u32 [#allocation7], 4
          %s192 = int_to_ptr.vmem [resolvable:$true] %s191
          %197 = dma.hbm_to_vmem [thread:$0]  %s3, 1024, %s192, [#allocation6], 64, 64, 4
        $region24: #{tpu_custom_call.1} parent=11 // pred_fallthru
          _
        // Predicated region
        $region25: #{tpu_custom_call.1} parent=11 // pred_check
          %p198 = pneg %p128
        $region26: #{tpu_custom_call.1} parent=11 // pred_check_branch
          %200 = sbr.rel (%p198) target = $region28
        $region27: #{tpu_custom_call.1} parent=11 // pred_region
          _
        $region28: #{tpu_custom_call.1} parent=11 // pred_fallthru
          _
      $region12: #{tpu_custom_call.1} parent=5 // pred_fallthru
        _
      %p201 = scmp.lt.s32.totalorder %s18, 2
      // Predicated region
      $region29: #{tpu_custom_call.1} parent=5 // pred_check
        %p202 = pneg %p201
      $region30: #{tpu_custom_call.1} parent=5 // pred_check_branch
        %204 = sbr.rel (%p202) target = $region32
      $region31: #{tpu_custom_call.1} parent=5 // pred_region
        // Predicated region
        $region33: #{tpu_custom_call.1} parent=31 // pred_check
          %p205 = pneg %p38
        $region34: #{tpu_custom_call.1} parent=31 // pred_check_branch
          %207 = sbr.rel (%p205) target = $region36
        $region35: #{tpu_custom_call.1} parent=31 // pred_region
          %s208 = sand.u32 %s28, 1
          %s209 = scalar_lea.sflag [#allocation3], %s208
          %s210 = sand.u32 %s28, 1
          %s211 = smul.addr %s210, 16
          %s212 = scalar_lea.vmem [#allocation2], %s211
          %s213 = smul.u32 4, %s18
          %s215 = ssub.s32 256, 256
          %216 = vsyncadd %s209, %s215
          %s217 = smul.addr %s213, 64
          %s218 = scalar_lea.hbm %s0, %s217
          %s219 = sshll.u32 %s212, 4
          %s220 = int_to_ptr.vmem [resolvable:$true] %s219
          %225 = dma.hbm_to_vmem [thread:$0]  %s218, 256, %s220, %s209, 64, 64, 4
        $region36: #{tpu_custom_call.1} parent=31 // pred_fallthru
          _
      $region32: #{tpu_custom_call.1} parent=5 // pred_fallthru
        _
      %p226 = scmp.le.s32.totalorder 1, %s18
      %p227 = scmp.lt.s32.totalorder %s18, 3
      %p228 = pnand %p226, %p227
      %p229 = pneg %p228
      // Predicated region
      $region37: #{tpu_custom_call.1} parent=5 // pred_check
        _
      $region38: #{tpu_custom_call.1} parent=5 // pred_check_branch
        %231 = sbr.rel (%p228) target = $region40
      $region39: #{tpu_custom_call.1} parent=5 // pred_region
        %s232 = ssub.s32 %s18, 1
        %s233 = sand.u32 %s31, 1
        %s234 = scalar_lea.sflag [#allocation3], %s233
        %s235 = sand.u32 %s31, 1
        %s236 = smul.addr %s235, 16
        %s237 = scalar_lea.vmem [#allocation2], %s236
        // Predicated region
        $region41: #{tpu_custom_call.1} parent=39 // pred_check
          %p238 = pneg %p44
        $region42: #{tpu_custom_call.1} parent=39 // pred_check_branch
          %240 = sbr.rel (%p238) target = $region44
        $region43: #{tpu_custom_call.1} parent=39 // pred_region
          %241 = dma.done %s234, 256
        $region44: #{tpu_custom_call.1} parent=39 // pred_fallthru
          _
        // Predicated region
        $region45: #{tpu_custom_call.1} parent=39 // pred_check
          %p242 = pneg %p65
        $region46: #{tpu_custom_call.1} parent=39 // pred_check_branch
          %244 = sbr.rel (%p242) target = $region48
        $region47: #{tpu_custom_call.1} parent=39 // pred_region
          %245 = dma.done [#allocation6], 1024
        $region48: #{tpu_custom_call.1} parent=39 // pred_fallthru
          _
        // Predicated region
        $region49: #{tpu_custom_call.1} parent=39 // pred_check
          %p246 = pneg %p107
        $region50: #{tpu_custom_call.1} parent=39 // pred_check_branch
          %248 = sbr.rel (%p246) target = $region52
        $region51: #{tpu_custom_call.1} parent=39 // pred_region
          %249 = dma.done [#allocation6], 1024
        $region52: #{tpu_custom_call.1} parent=39 // pred_fallthru
          _
        %s250 = sand.u32 %s31, 1
        %s251 = scalar_lea.sflag [#allocation3], %s250
        %s252 = sand.u32 %s31, 1
        %s253 = smul.addr %s252, 16
        %s254 = scalar_lea.vmem [#allocation2], %s253
        %p255 = pneg %p44
        %p256 = pneg %p41
        %p257 = pneg %p65
        %p258 = pneg %p62
        %p259 = pneg %p86
        %p260 = pneg %p83
        %p261 = pneg %p107
        %p262 = pneg %p104
        %p263 = pneg %p128
        %p264 = pneg %p125
        %p265 = pneg %p154
        %p266 = pneg %p151
        %s267 = sand.u32 %s141, 1
        %s268 = scalar_lea.sflag [#allocation4], %s267
        %s269 = sand.u32 %s141, 1
        %s270 = smul.addr %s269, 32
        %s271 = scalar_lea.vmem [#allocation8], %s270
        %s272 = smul.u32 4, %s23
        %s273 = smul.u32 4, %s23
        %v275 = vld [vmem:[%s237] sm:$0xf]
        %v276 = vld [vmem:[%s237 + $0x4] sm:$0xf]
        %v277 = vld [vmem:[%s237 + $0x8] sm:$0xf]
        %v278 = vld [vmem:[%s237 + $0xc] sm:$0xf]
        %v279 = vld [vmem:[#allocation5] sm:$0xf]
        %v280 = vld [vmem:[#allocation5 + $0x4] sm:$0xf]
        %v281 = vld [vmem:[#allocation5 + $0x8] sm:$0xf]
        %v282 = vld [vmem:[#allocation5 + $0xc] sm:$0xf]
        %v283 = vld [vmem:[#allocation5 + $0x10] sm:$0xf]
        %v284 = vld [vmem:[#allocation5 + $0x14] sm:$0xf]
        %v285 = vld [vmem:[#allocation5 + $0x18] sm:$0xf]
        %v286 = vld [vmem:[#allocation5 + $0x1c] sm:$0xf]
        %v287 = vld [vmem:[#allocation5 + $0x20] sm:$0xf]
        %v288 = vld [vmem:[#allocation5 + $0x24] sm:$0xf]
        %v289 = vld [vmem:[#allocation5 + $0x28] sm:$0xf]
        %v290 = vld [vmem:[#allocation5 + $0x2c] sm:$0xf]
        %v291 = vld [vmem:[#allocation5 + $0x30] sm:$0xf]
        %v292 = vld [vmem:[#allocation5 + $0x34] sm:$0xf]
        %v293 = vld [vmem:[#allocation5 + $0x38] sm:$0xf]
        %v294 = vld [vmem:[#allocation5 + $0x3c] sm:$0xf]
        %v295 = vld [vmem:[%s2] sm:$0x1]
        %v297 = vlaneseq
        %v298 = vshrl.u32 %v297, 7
        %v299 = vsub.s32 0, %v298
        %v300 = vrot.slane %v295, %v299
        %v306 = vunpack.c.l.b16 %v275
        %v307 = vunpack.c.l.b16 %v276
        %v308 = vunpack.c.l.b16 %v277
        %v309 = vunpack.c.l.b16 %v278
        %v310 = vpack.c.b16 %v307, %v306
        %v311 = vpack.c.b16 %v309, %v308
        %v330 = vunpack.c.l.b16 %v279
        %v331 = vunpack.c.l.b16 %v280
        %v332 = vunpack.c.l.b16 %v281
        %v333 = vunpack.c.l.b16 %v282
        %v334 = vunpack.c.l.b16 %v283
        %v335 = vunpack.c.l.b16 %v284
        %v336 = vunpack.c.l.b16 %v285
        %v337 = vunpack.c.l.b16 %v286
        %v338 = vunpack.c.l.b16 %v287
        %v339 = vunpack.c.l.b16 %v288
        %v340 = vunpack.c.l.b16 %v289
        %v341 = vunpack.c.l.b16 %v290
        %v342 = vunpack.c.l.b16 %v291
        %v343 = vunpack.c.l.b16 %v292
        %v344 = vunpack.c.l.b16 %v293
        %v345 = vunpack.c.l.b16 %v294
        %v346 = vpack.c.b16 %v331, %v330
        %v347 = vpack.c.b16 %v333, %v332
        %v348 = vpack.c.b16 %v335, %v334
        %v349 = vpack.c.b16 %v337, %v336
        %v350 = vpack.c.b16 %v339, %v338
        %v351 = vpack.c.b16 %v341, %v340
        %v352 = vpack.c.b16 %v343, %v342
        %v353 = vpack.c.b16 %v345, %v344
        %362 = vmatprep.subr.bf16.mxu0 0
        %363 = vmatpush1.bf16.msra.mxu0 %v346
        %364 = vmatprep.subr.bf16.mxu0 0
        %365 = vmatpush1.bf16.msra.mxu0 %v347
        %366 = vmatprep.subr.bf16.mxu0 0
        %367 = vmatpush1.bf16.msra.mxu0 %v348
        %368 = vmatprep.subr.bf16.mxu0 0
        %369 = vmatpush1.bf16.msra.mxu0 %v349
        %370 = vmatprep.subr.bf16.mxu0 0
        %371 = vmatpush1.bf16.msra.mxu0 %v350
        %372 = vmatprep.subr.bf16.mxu0 0
        %373 = vmatpush1.bf16.msra.mxu0 %v351
        %374 = vmatprep.subr.bf16.mxu0 0
        %375 = vmatpush1.bf16.msra.mxu0 %v352
        %376 = vmatprep.subr.bf16.mxu0 0
        %377 = vmatpush1.bf16.msra.mxu0 %v353
        %378 = vmatprep.subr.bf16.mxu0 0
        %379 = vmatpush1.bf16.msra.mxu0 0
        %380 = vmatprep.subr.bf16.mxu0 0
        %381 = vmatpush1.bf16.msra.mxu0 0
        %382 = vmatprep.subr.bf16.mxu0 0
        %383 = vmatpush1.bf16.msra.mxu0 0
        %384 = vmatprep.subr.bf16.mxu0 0
        %385 = vmatpush1.bf16.msra.mxu0 0
        %386 = vmatprep.subr.bf16.mxu0 0
        %387 = vmatpush1.bf16.msra.mxu0 0
        %388 = vmatprep.subr.bf16.mxu0 0
        %389 = vmatpush1.bf16.msra.mxu0 0
        %390 = vmatprep.subr.bf16.mxu0 0
        %391 = vmatpush1.bf16.msra.mxu0 0
        %392 = vmatprep.subr.bf16.mxu0 0
        %393 = vmatpush1.bf16.msra.mxu0 0
        %394 = vmatprep.mubr.bf16.mxu0 0
        %395 = vmatmul.mubr.bf16.gmra.mrb[0].mxu0 %v310
        %v396 = vpop.f32.mrb[0].mxu0
        %v397 = vadd.f32 %v300, %v396
        %v398 = vpop.f32.mrb[0].mxu0
        %v399 = vpop.f32.mrb[0].mxu0
        %v400 = vadd.f32 %v300, %v399
        %v401 = vpop.f32.mrb[0].mxu0
        %402 = vmatprep.mubr.bf16.mxu0 0
        %403 = vmatmul.mubr.bf16.gmra.mrb[0].mxu0 %v311
        %v404 = vpop.f32.mrb[0].mxu0
        %v405 = vadd.f32 %v300, %v404
        %v406 = vpop.f32.mrb[0].mxu0
        %v407 = vpop.f32.mrb[0].mxu0
        %v408 = vadd.f32 %v300, %v407
        %v409 = vpop.f32.mrb[0].mxu0
        %410 = vdwg.mxu0
        %v411 = vsub.f32 0.0, %v397
        %v412 = vsub.f32 0.0, %v400
        %v413 = vsub.f32 0.0, %v405
        %v414 = vsub.f32 0.0, %v408
        %v415 = vmul.f32 %v411, 1.442695
        %v416 = vpow.pop %v415
        %v417 = vmul.f32 %v412, 1.442695
        %v418 = vpow.pop %v417
        %v419 = vmul.f32 %v413, 1.442695
        %v420 = vpow.pop %v419
        %v421 = vmul.f32 %v414, 1.442695
        %v422 = vpow.pop %v421
        %v423 = vadd.f32 %v416, 1.0
        %v424 = vadd.f32 %v418, 1.0
        %v425 = vadd.f32 %v420, 1.0
        %v426 = vadd.f32 %v422, 1.0
        %v427 = vrcp.pop %v423
        %v428 = vrcp.pop %v424
        %v429 = vrcp.pop %v425
        %v430 = vrcp.pop %v426
        %v431 = vpack.c.bf16 %v428, %v427
        %v432 = vpack.c.bf16 %v430, %v429
        %v433 = vld [vmem:[#allocation7] sm:$0xf]
        %v434 = vld [vmem:[#allocation7 + $0x4] sm:$0xf]
        %v435 = vld [vmem:[#allocation7 + $0x8] sm:$0xf]
        %v436 = vld [vmem:[#allocation7 + $0xc] sm:$0xf]
        %v437 = vld [vmem:[#allocation7 + $0x10] sm:$0xf]
        %v438 = vld [vmem:[#allocation7 + $0x14] sm:$0xf]
        %v439 = vld [vmem:[#allocation7 + $0x18] sm:$0xf]
        %v440 = vld [vmem:[#allocation7 + $0x1c] sm:$0xf]
        %v441 = vld [vmem:[#allocation7 + $0x20] sm:$0xf]
        %v442 = vld [vmem:[#allocation7 + $0x24] sm:$0xf]
        %v443 = vld [vmem:[#allocation7 + $0x28] sm:$0xf]
        %v444 = vld [vmem:[#allocation7 + $0x2c] sm:$0xf]
        %v445 = vld [vmem:[#allocation7 + $0x30] sm:$0xf]
        %v446 = vld [vmem:[#allocation7 + $0x34] sm:$0xf]
        %v447 = vld [vmem:[#allocation7 + $0x38] sm:$0xf]
        %v448 = vld [vmem:[#allocation7 + $0x3c] sm:$0xf]
        %v449 = vld [vmem:[%s4] sm:$0x1]
        %v451 = vlaneseq
        %v452 = vshrl.u32 %v451, 7
        %v453 = vsub.s32 0, %v452
        %v454 = vrot.slane %v449, %v453
        %v472 = vunpack.c.l.b16 %v433
        %v473 = vunpack.c.l.b16 %v434
        %v474 = vunpack.c.l.b16 %v435
        %v475 = vunpack.c.l.b16 %v436
        %v476 = vunpack.c.l.b16 %v437
        %v477 = vunpack.c.l.b16 %v438
        %v478 = vunpack.c.l.b16 %v439
        %v479 = vunpack.c.l.b16 %v440
        %v480 = vunpack.c.l.b16 %v441
        %v481 = vunpack.c.l.b16 %v442
        %v482 = vunpack.c.l.b16 %v443
        %v483 = vunpack.c.l.b16 %v444
        %v484 = vunpack.c.l.b16 %v445
        %v485 = vunpack.c.l.b16 %v446
        %v486 = vunpack.c.l.b16 %v447
        %v487 = vunpack.c.l.b16 %v448
        %v488 = vpack.c.b16 %v473, %v472
        %v489 = vpack.c.b16 %v475, %v474
        %v490 = vpack.c.b16 %v477, %v476
        %v491 = vpack.c.b16 %v479, %v478
        %v492 = vpack.c.b16 %v481, %v480
        %v493 = vpack.c.b16 %v483, %v482
        %v494 = vpack.c.b16 %v485, %v484
        %v495 = vpack.c.b16 %v487, %v486
        %504 = vmatprep.subr.bf16.mxu0 0
        %505 = vmatpush1.bf16.msra.mxu0 %v488
        %506 = vmatprep.subr.bf16.mxu0 0
        %507 = vmatpush1.bf16.msra.mxu0 %v489
        %508 = vmatprep.subr.bf16.mxu0 0
        %509 = vmatpush1.bf16.msra.mxu0 %v490
        %510 = vmatprep.subr.bf16.mxu0 0
        %511 = vmatpush1.bf16.msra.mxu0 %v491
        %512 = vmatprep.subr.bf16.mxu0 0
        %513 = vmatpush1.bf16.msra.mxu0 %v492
        %514 = vmatprep.subr.bf16.mxu0 0
        %515 = vmatpush1.bf16.msra.mxu0 %v493
        %516 = vmatprep.subr.bf16.mxu0 0
        %517 = vmatpush1.bf16.msra.mxu0 %v494
        %518 = vmatprep.subr.bf16.mxu0 0
        %519 = vmatpush1.bf16.msra.mxu0 %v495
        %520 = vmatprep.subr.bf16.mxu0 0
        %521 = vmatpush1.bf16.msra.mxu0 0
        %522 = vmatprep.subr.bf16.mxu0 0
        %523 = vmatpush1.bf16.msra.mxu0 0
        %524 = vmatprep.subr.bf16.mxu0 0
        %525 = vmatpush1.bf16.msra.mxu0 0
        %526 = vmatprep.subr.bf16.mxu0 0
        %527 = vmatpush1.bf16.msra.mxu0 0
        %528 = vmatprep.subr.bf16.mxu0 0
        %529 = vmatpush1.bf16.msra.mxu0 0
        %530 = vmatprep.subr.bf16.mxu0 0
        %531 = vmatpush1.bf16.msra.mxu0 0
        %532 = vmatprep.subr.bf16.mxu0 0
        %533 = vmatpush1.bf16.msra.mxu0 0
        %534 = vmatprep.subr.bf16.mxu0 0
        %535 = vmatpush1.bf16.msra.mxu0 0
        %536 = vmatprep.mubr.bf16.mxu0 0
        %537 = vmatmul.mubr.bf16.gmra.mrb[0].mxu0 %v431
        %v538 = vpop.f32.mrb[0].mxu0
        %v539 = vadd.f32 %v454, %v538
        %v540 = vpop.f32.mrb[0].mxu0
        %v541 = vpop.f32.mrb[0].mxu0
        %v542 = vadd.f32 %v454, %v541
        %v543 = vpop.f32.mrb[0].mxu0
        %544 = vmatprep.mubr.bf16.mxu0 0
        %545 = vmatmul.mubr.bf16.gmra.mrb[0].mxu0 %v432
        %v546 = vpop.f32.mrb[0].mxu0
        %v547 = vadd.f32 %v454, %v546
        %v548 = vpop.f32.mrb[0].mxu0
        %v549 = vpop.f32.mrb[0].mxu0
        %v550 = vadd.f32 %v454, %v549
        %v551 = vpop.f32.mrb[0].mxu0
        %552 = vdwg.mxu0
        %v553 = vsub.f32 0.0, %v539
        %v554 = vsub.f32 0.0, %v542
        %v555 = vsub.f32 0.0, %v547
        %v556 = vsub.f32 0.0, %v550
        %v557 = vmul.f32 %v553, 1.442695
        %v558 = vpow.pop %v557
        %v559 = vmul.f32 %v554, 1.442695
        %v560 = vpow.pop %v559
        %v561 = vmul.f32 %v555, 1.442695
        %v562 = vpow.pop %v561
        %v563 = vmul.f32 %v556, 1.442695
        %v564 = vpow.pop %v563
        %v565 = vadd.f32 %v558, 1.0
        %v566 = vadd.f32 %v560, 1.0
        %v567 = vadd.f32 %v562, 1.0
        %v568 = vadd.f32 %v564, 1.0
        %v569 = vrcp.pop %v565
        %v570 = vrcp.pop %v566
        %v571 = vrcp.pop %v567
        %v572 = vrcp.pop %v568
        %573 = vst [vmem:[%s271] sm:$0xff] %v569
        %574 = vst [vmem:[%s271 + $0x8] sm:$0xff] %v570
        %575 = vst [vmem:[%s271 + $0x10] sm:$0xff] %v571
        %576 = vst [vmem:[%s271 + $0x18] sm:$0xff] %v572
        %s577 = sand.u32 %s141, 1
        %s578 = scalar_lea.sflag [#allocation4], %s577
        %s579 = sand.u32 %s141, 1
        %s580 = smul.addr %s579, 32
        %s581 = scalar_lea.vmem [#allocation8], %s580
        // Predicated region
        $region53: #{tpu_custom_call.1} parent=39 // pred_check
          %p582 = pneg %p151
        $region54: #{tpu_custom_call.1} parent=39 // pred_check_branch
          %584 = sbr.rel (%p582) target = $region56
        $region55: #{tpu_custom_call.1} parent=39 // pred_region
          %s585 = smul.u32 4, %s23
          %s587 = ssub.s32 512, 512
          %588 = vsyncadd %s578, %s587
          %s589 = smul.addr %s585, 128
          %s590 = scalar_lea.hbm %s5, %s589
          %s591 = sshll.u32 %s581, 4
          %s592 = int_to_ptr.vmem [resolvable:$true] %s591
          %597 = dma.vmem_to_hbm [thread:$0]  %s592, 512, %s590, %s578, 128, 128, 8
        $region56: #{tpu_custom_call.1} parent=39 // pred_fallthru
          _
      $region40: #{tpu_custom_call.1} parent=5 // pred_fallthru
        _
      %p598 = scmp.le.s32.totalorder 2, %s18
      // Predicated region
      $region57: #{tpu_custom_call.1} parent=5 // pred_check
        %p599 = pneg %p598
      $region58: #{tpu_custom_call.1} parent=5 // pred_check_branch
        %601 = sbr.rel (%p599) target = $region60
      $region59: #{tpu_custom_call.1} parent=5 // pred_region
        %s602 = ssub.s32 %s18, 2
        // Predicated region
        $region61: #{tpu_custom_call.1} parent=59 // pred_check
          %p603 = pneg %p157
        $region62: #{tpu_custom_call.1} parent=59 // pred_check_branch
          %605 = sbr.rel (%p603) target = $region64
        $region63: #{tpu_custom_call.1} parent=59 // pred_region
          %s606 = sand.u32 %s142, 1
          %s607 = scalar_lea.sflag [#allocation4], %s606
          %s608 = sand.u32 %s142, 1
          %s609 = smul.addr %s608, 32
          %s610 = scalar_lea.vmem [#allocation8], %s609
          %611 = dma.done %s607, 512
        $region64: #{tpu_custom_call.1} parent=59 // pred_fallthru
          _
      $region60: #{tpu_custom_call.1} parent=5 // pred_fallthru
        _
    $region6: #{tpu_custom_call.1} parent=1 // loop_footer
      %s22 = sadd.s32 1, %s18
    $region7: #{tpu_custom_call.1} parent=1 // loop_footer_branch
      %17 = sbr.rel target = $region3
    $region8: #{tpu_custom_call.1} parent=1 // loop_exit
      _
    %612 = vsyncpa [#allocation3], 1
    %s613 = scalar_lea.sflag [#allocation3], 1
    %614 = vsyncpa %s613, 1
    %615 = vsyncpa [#allocation6], 1
    %616 = vsyncpa [#allocation4], 1
    %s617 = scalar_lea.sflag [#allocation4], 1
    %618 = vsyncpa %s617, 1

// kernel: tpu_custom_call.1
$region0: #{tpu_custom_call.1}
  #allocation0 [shape = 'u32[]', space=smem, size = 0x4, offset = 0x4, fixed_abs, tag = 'smem constant byte address 0x4 - core index']
  #allocation1 [shape = 'u32[144,128]{1,0:T(1,128)}', space=vmem, size = 0x12000, scoped, tag = 'internal scratch']
  %s0 = inlined_call_operand.hbm [shape: bf16[64,128], index: 0, kind: input, shape index: {}]
  %s1 = inlined_call_operand.hbm [shape: bf16[128,128], index: 1, kind: input, shape index: {}]
  %s2 = inlined_call_operand.vmem [shape: f32[1,128], index: 2, kind: input, shape index: {}]
  %s3 = inlined_call_operand.hbm [shape: bf16[128,128], index: 3, kind: input, shape index: {}]
  %s4 = inlined_call_operand.vmem [shape: f32[1,128], index: 4, kind: input, shape index: {}]
  %s5 = inlined_call_operand.hbm [shape: f32[64,128], index: 5, kind: output, shape index: {}]
  %s6 = sld [smem:[#allocation0]]
  $region65: #{tpu_custom_call.1} parent=0
    _
  %s8 = ssub.s32 1, %s6
  %s9 = scalar_select 0, %s8, %s6
  $region1: #{tpu_custom_call.1} parent=0
    #allocation2 [shape = 'u8[16384]{0}', space=vmem, size = 0x4000, scoped, tag = 'input window, operand 0']
    #allocation3 [shape = 's32[2]{0}', space=sflag, size = 0x8, scoped, tag = 'scoped memory for tpu_custom_call.1']
    #allocation4 [shape = 's32[2]{0}', space=sflag, size = 0x8, scoped, tag = 'scoped memory for tpu_custom_call.1']
    #allocation5 [shape = 'u8[32768]{0}', space=vmem, size = 0x8000, scoped, tag = 'input window, operand 1, single buffered']
    #allocation6 [shape = 's32[1]{0}', space=sflag, size = 0x4, scoped, tag = 'scoped memory for tpu_custom_call.1']
    #allocation7 [shape = 'u8[32768]{0}', space=vmem, size = 0x8000, scoped, tag = 'input window, operand 3, single buffered']
    #allocation8 [shape = 'u8[32768]{0}', space=vmem, size = 0x8000, scoped, tag = 'output window, operand 0']
    %10 = vsyncpa [#allocation3], 0
    %s11 = scalar_lea.sflag [#allocation3], 1
    %12 = vsyncpa %s11, 0
    %13 = vsyncpa [#allocation6], 0
    %14 = vsyncpa [#allocation4], 0
    %s15 = scalar_lea.sflag [#allocation4], 1
    %16 = vsyncpa %s15, 0
    loop: start=0, step=1, limit=4
    $region2: #{tpu_custom_call.1} parent=1 // loop_pre_header
      _
    $region3: #{tpu_custom_call.1} parent=1 // loop_header
      %s18 = sphi 0, %s22
      %p19 = scmp.ge.s32.totalorder %s18, 4
      %s28 = sphi 0, %s30
      %s31 = sphi 0, %s28
      %s32 = sphi 0, %s31
      %s48 = sphi 0, %s32
      %s52 = sphi 0, %s52
      %s54 = sphi 0, %s52
      %s55 = sphi 0, %s54
      %s69 = sphi 0, %s55
      %s73 = sphi 0, %s73
      %s75 = sphi 0, %s73
      %s76 = sphi 0, %s75
      %s90 = sphi 0, %s76
      %s94 = sphi 0, %s94
      %s96 = sphi 0, %s94
      %s97 = sphi 0, %s96
      %s111 = sphi 0, %s97
      %s115 = sphi 0, %s115
      %s117 = sphi 0, %s115
      %s118 = sphi 0, %s117
      %s132 = sphi 0, %s118
      %s138 = sphi 0, %s140
      %s141 = sphi 0, %s138
      %s142 = sphi 0, %s141
      %s158 = sphi 0, %s142
    $region4: #{tpu_custom_call.1} parent=1 // loop_header_branch
      %21 = sbr.rel (%p19) target = $region8
    $region5: #{tpu_custom_call.1} parent=1 // loop_body
      %s23 = ssub.s32 %s18, 1
      %s24 = ssub.s32 %s18, 2
      %s25 = sadd.s32 %s18, 1
      %s26 = ssub.s32 %s18, %s25
      %p27 = scmp.eq.s32.totalorder %s26, 0
      %s29 = sadd.s32 %s28, 1
      %s30 = scalar_select %p27, %s28, %s29
      %p33 = pneg %p27
      %p34 = scmp.eq.s32.totalorder %s18, 1
      %p35 = por %p33, %p34
      %p36 = scmp.ne.s32.totalorder %s28, %s31
      %p37 = scmp.eq.s32.totalorder %s18, 0
      %p38 = por %p36, %p37
      %p39 = scmp.ne.s32.totalorder %s28, %s31
      %p40 = scmp.eq.s32.totalorder %s23, 1
      %p41 = por %p39, %p40
      %p42 = scmp.ne.s32.totalorder %s31, %s32
      %p43 = scmp.eq.s32.totalorder %s23, 0
      %p44 = por %p42, %p43
      %p45 = scmp.ne.s32.totalorder %s31, %s32
      %p46 = scmp.eq.s32.totalorder %s24, 1
      %p47 = por %p45, %p46
      %p49 = scmp.ne.s32.totalorder %s32, %s48
      %p50 = scmp.eq.s32.totalorder %s24, 0
      %p51 = por %p49, %p50
      %s53 = sadd.s32 %s52, 1
      %p56 = scmp.eq.s32.totalorder %s18, 1
      %p57 = scmp.ne.s32.totalorder %s52, %s54
      %p58 = scmp.eq.s32.totalorder %s18, 0
      %p59 = por %p57, %p58
      %p60 = scmp.ne.s32.totalorder %s52, %s54
      %p61 = scmp.eq.s32.totalorder %s23, 1
      %p62 = por %p60, %p61
      %p63 = scmp.ne.s32.totalorder %s54, %s55
      %p64 = scmp.eq.s32.totalorder %s23, 0
      %p65 = por %p63, %p64
      %p66 = scmp.ne.s32.totalorder %s54, %s55
      %p67 = scmp.eq.s32.totalorder %s24, 1
      %p68 = por %p66, %p67
      %p70 = scmp.ne.s32.totalorder %s55, %s69
      %p71 = scmp.eq.s32.totalorder %s24, 0
      %p72 = por %p70, %p71
      %s74 = sadd.s32 %s73, 1
      %p77 = scmp.eq.s32.totalorder %s18, 1
      %p78 = scmp.ne.s32.totalorder %s73, %s75
      %p79 = scmp.eq.s32.totalorder %s18, 0
      %p80 = por %p78, %p79
      %p81 = scmp.ne.s32.totalorder %s73, %s75
      %p82 = scmp.eq.s32.totalorder %s23, 1
      %p83 = por %p81, %p82
      %p84 = scmp.ne.s32.totalorder %s75, %s76
      %p85 = scmp.eq.s32.totalorder %s23, 0
      %p86 = por %p84, %p85
      %p87 = scmp.ne.s32.totalorder %s75, %s76
      %p88 = scmp.eq.s32.totalorder %s24, 1
      %p89 = por %p87, %p88
      %p91 = scmp.ne.s32.totalorder %s76, %s90
      %p92 = scmp.eq.s32.totalorder %s24, 0
      %p93 = por %p91, %p92
      %s95 = sadd.s32 %s94, 1
      %p98 = scmp.eq.s32.totalorder %s18, 1
      %p99 = scmp.ne.s32.totalorder %s94, %s96
      %p100 = scmp.eq.s32.totalorder %s18, 0
      %p101 = por %p99, %p100
      %p102 = scmp.ne.s32.totalorder %s94, %s96
      %p103 = scmp.eq.s32.totalorder %s23, 1
      %p104 = por %p102, %p103
      %p105 = scmp.ne.s32.totalorder %s96, %s97
      %p106 = scmp.eq.s32.totalorder %s23, 0
      %p107 = por %p105, %p106
      %p108 = scmp.ne.s32.totalorder %s96, %s97
      %p109 = scmp.eq.s32.totalorder %s24, 1
      %p110 = por %p108, %p109
      %p112 = scmp.ne.s32.totalorder %s97, %s111
      %p113 = scmp.eq.s32.totalorder %s24, 0
      %p114 = por %p112, %p113
      %s116 = sadd.s32 %s115, 1
      %p119 = scmp.eq.s32.totalorder %s18, 1
      %p120 = scmp.ne.s32.totalorder %s115, %s117
      %p121 = scmp.eq.s32.totalorder %s18, 0
      %p122 = por %p120, %p121
      %p123 = scmp.ne.s32.totalorder %s115, %s117
      %p124 = scmp.eq.s32.totalorder %s23, 1
      %p125 = por %p123, %p124
      %p126 = scmp.ne.s32.totalorder %s117, %s118
      %p127 = scmp.eq.s32.totalorder %s23, 0
      %p128 = por %p126, %p127
      %p129 = scmp.ne.s32.totalorder %s117, %s118
      %p130 = scmp.eq.s32.totalorder %s24, 1
      %p131 = por %p129, %p130
      %p133 = scmp.ne.s32.totalorder %s118, %s132
      %p134 = scmp.eq.s32.totalorder %s24, 0
      %p135 = por %p133, %p134
      %s136 = ssub.s32 %s18, %s25
      %p137 = scmp.eq.s32.totalorder %s136, 0
      %s139 = sadd.s32 %s138, 1
      %s140 = scalar_select %p137, %s138, %s139
      %p143 = pneg %p137
      %p144 = scmp.eq.s32.totalorder %s18, 1
      %p145 = por %p143, %p144
      %p146 = scmp.ne.s32.totalorder %s138, %s141
      %p147 = scmp.eq.s32.totalorder %s18, 0
      %p148 = por %p146, %p147
      %p149 = scmp.ne.s32.totalorder %s138, %s141
      %p150 = scmp.eq.s32.totalorder %s23, 1
      %p151 = por %p149, %p150
      %p152 = scmp.ne.s32.totalorder %s141, %s142
      %p153 = scmp.eq.s32.totalorder %s23, 0
      %p154 = por %p152, %p153
      %p155 = scmp.ne.s32.totalorder %s141, %s142
      %p156 = scmp.eq.s32.totalorder %s24, 1
      %p157 = por %p155, %p156
      %p159 = scmp.ne.s32.totalorder %s142, %s158
      %p160 = scmp.eq.s32.totalorder %s24, 0
      %p161 = por %p159, %p160
      %p162 = scmp.le.s32.totalorder 1, %s18
      %p163 = scmp.lt.s32.totalorder %s18, 3
      %p164 = pnand %p162, %p163
      %p165 = pneg %p164
      // Predicated region
      $region9: #{tpu_custom_call.1} parent=5 // pred_check
        _
      $region10: #{tpu_custom_call.1} parent=5 // pred_check_branch
        %167 = sbr.rel (%p164) target = $region12
      $region11: #{tpu_custom_call.1} parent=5 // pred_region
        %s168 = ssub.s32 %s18, 1
        // Predicated region
        $region13: #{tpu_custom_call.1} parent=11 // pred_check
          %p169 = pneg %p65
        $region14: #{tpu_custom_call.1} parent=11 // pred_check_branch
          %171 = sbr.rel (%p169) target = $region16
        $region15: #{tpu_custom_call.1} parent=11 // pred_region
          %s173 = ssub.s32 1024, 1024
          %174 = vsyncadd [#allocation6], %s173
          %s175 = sshll.u32 [#allocation5], 4
          %s176 = int_to_ptr.vmem [resolvable:$true] %s175
          %181 = dma.hbm_to_vmem [thread:$0]  %s1, 1024, %s176, [#allocation6], 64, 64, 4
        $region16: #{tpu_custom_call.1} parent=11 // pred_fallthru
          _
        // Predicated region
        $region17: #{tpu_custom_call.1} parent=11 // pred_check
          %p182 = pneg %p86
        $region18: #{tpu_custom_call.1} parent=11 // pred_check_branch
          %184 = sbr.rel (%p182) target = $region20
        $region19: #{tpu_custom_call.1} parent=11 // pred_region
          _
        $region20: #{tpu_custom_call.1} parent=11 // pred_fallthru
          _
        // Predicated region
        $region21: #{tpu_custom_call.1} parent=11 // pred_check
          %p185 = pneg %p107
        $region22: #{tpu_custom_call.1} parent=11 // pred_check_branch
          %187 = sbr.rel (%p185) target = $region24
        $region23: #{tpu_custom_call.1} parent=11 // pred_region
          %s189 = ssub.s32 1024, 1024
          %190 = vsyncadd [#allocation6], %s189
          %s191 = sshll.u32 [#allocation7], 4
          %s192 = int_to_ptr.vmem [resolvable:$true] %s191
          %197 = dma.hbm_to_vmem [thread:$0]  %s3, 1024, %s192, [#allocation6], 64, 64, 4
        $region24: #{tpu_custom_call.1} parent=11 // pred_fallthru
          _
        // Predicated region
        $region25: #{tpu_custom_call.1} parent=11 // pred_check
          %p198 = pneg %p128
        $region26: #{tpu_custom_call.1} parent=11 // pred_check_branch
          %200 = sbr.rel (%p198) target = $region28
        $region27: #{tpu_custom_call.1} parent=11 // pred_region
          _
        $region28: #{tpu_custom_call.1} parent=11 // pred_fallthru
          _
      $region12: #{tpu_custom_call.1} parent=5 // pred_fallthru
        _
      %p201 = scmp.lt.s32.totalorder %s18, 2
      // Predicated region
      $region29: #{tpu_custom_call.1} parent=5 // pred_check
        %p202 = pneg %p201
      $region30: #{tpu_custom_call.1} parent=5 // pred_check_branch
        %204 = sbr.rel (%p202) target = $region32
      $region31: #{tpu_custom_call.1} parent=5 // pred_region
        // Predicated region
        $region33: #{tpu_custom_call.1} parent=31 // pred_check
          %p205 = pneg %p38
        $region34: #{tpu_custom_call.1} parent=31 // pred_check_branch
          %207 = sbr.rel (%p205) target = $region36
        $region35: #{tpu_custom_call.1} parent=31 // pred_region
          %s208 = sand.u32 %s28, 1
          %s209 = scalar_lea.sflag [#allocation3], %s208
          %s210 = sand.u32 %s28, 1
          %s211 = smul.addr %s210, 16
          %s212 = scalar_lea.vmem [#allocation2], %s211
          %s213 = smul.u32 4, %s18
          %s215 = ssub.s32 256, 256
          %216 = vsyncadd %s209, %s215
          %s217 = smul.addr %s213, 64
          %s218 = scalar_lea.hbm %s0, %s217
          %s219 = sshll.u32 %s212, 4
          %s220 = int_to_ptr.vmem [resolvable:$true] %s219
          %225 = dma.hbm_to_vmem [thread:$0]  %s218, 256, %s220, %s209, 64, 64, 4
        $region36: #{tpu_custom_call.1} parent=31 // pred_fallthru
          _
      $region32: #{tpu_custom_call.1} parent=5 // pred_fallthru
        _
      %p226 = scmp.le.s32.totalorder 1, %s18
      %p227 = scmp.lt.s32.totalorder %s18, 3
      %p228 = pnand %p226, %p227
      %p229 = pneg %p228
      // Predicated region
      $region37: #{tpu_custom_call.1} parent=5 // pred_check
        _
      $region38: #{tpu_custom_call.1} parent=5 // pred_check_branch
        %231 = sbr.rel (%p228) target = $region40
      $region39: #{tpu_custom_call.1} parent=5 // pred_region
        %s232 = ssub.s32 %s18, 1
        %s233 = sand.u32 %s31, 1
        %s234 = scalar_lea.sflag [#allocation3], %s233
        %s235 = sand.u32 %s31, 1
        %s236 = smul.addr %s235, 16
        %s237 = scalar_lea.vmem [#allocation2], %s236
        // Predicated region
        $region41: #{tpu_custom_call.1} parent=39 // pred_check
          %p238 = pneg %p44
        $region42: #{tpu_custom_call.1} parent=39 // pred_check_branch
          %240 = sbr.rel (%p238) target = $region44
        $region43: #{tpu_custom_call.1} parent=39 // pred_region
          %241 = dma.done %s234, 256
        $region44: #{tpu_custom_call.1} parent=39 // pred_fallthru
          _
        // Predicated region
        $region45: #{tpu_custom_call.1} parent=39 // pred_check
          %p242 = pneg %p65
        $region46: #{tpu_custom_call.1} parent=39 // pred_check_branch
          %244 = sbr.rel (%p242) target = $region48
        $region47: #{tpu_custom_call.1} parent=39 // pred_region
          %245 = dma.done [#allocation6], 1024
        $region48: #{tpu_custom_call.1} parent=39 // pred_fallthru
          _
        // Predicated region
        $region49: #{tpu_custom_call.1} parent=39 // pred_check
          %p246 = pneg %p107
        $region50: #{tpu_custom_call.1} parent=39 // pred_check_branch
          %248 = sbr.rel (%p246) target = $region52
        $region51: #{tpu_custom_call.1} parent=39 // pred_region
          %249 = dma.done [#allocation6], 1024
        $region52: #{tpu_custom_call.1} parent=39 // pred_fallthru
          _
        %s250 = sand.u32 %s31, 1
        %s251 = scalar_lea.sflag [#allocation3], %s250
        %s252 = sand.u32 %s31, 1
        %s253 = smul.addr %s252, 16
        %s254 = scalar_lea.vmem [#allocation2], %s253
        %p255 = pneg %p44
        %p256 = pneg %p41
        %p257 = pneg %p65
        %p258 = pneg %p62
        %p259 = pneg %p86
        %p260 = pneg %p83
        %p261 = pneg %p107
        %p262 = pneg %p104
        %p263 = pneg %p128
        %p264 = pneg %p125
        %p265 = pneg %p154
        %p266 = pneg %p151
        %s267 = sand.u32 %s141, 1
        %s268 = scalar_lea.sflag [#allocation4], %s267
        %s269 = sand.u32 %s141, 1
        %s270 = smul.addr %s269, 32
        %s271 = scalar_lea.vmem [#allocation8], %s270
        %s272 = smul.u32 4, %s23
        %s273 = smul.u32 4, %s23
        %v275 = vld [vmem:[%s237] sm:$0xf]
        %v276 = vld [vmem:[%s237 + $0x4] sm:$0xf]
        %v277 = vld [vmem:[%s237 + $0x8] sm:$0xf]
        %v278 = vld [vmem:[%s237 + $0xc] sm:$0xf]
        %v279 = vld [vmem:[#allocation5] sm:$0xf]
        %v280 = vld [vmem:[#allocation5 + $0x4] sm:$0xf]
        %v281 = vld [vmem:[#allocation5 + $0x8] sm:$0xf]
        %v282 = vld [vmem:[#allocation5 + $0xc] sm:$0xf]
        %v283 = vld [vmem:[#allocation5 + $0x10] sm:$0xf]
        %v284 = vld [vmem:[#allocation5 + $0x14] sm:$0xf]
        %v285 = vld [vmem:[#allocation5 + $0x18] sm:$0xf]
        %v286 = vld [vmem:[#allocation5 + $0x1c] sm:$0xf]
        %v287 = vld [vmem:[#allocation5 + $0x20] sm:$0xf]
        %v288 = vld [vmem:[#allocation5 + $0x24] sm:$0xf]
        %v289 = vld [vmem:[#allocation5 + $0x28] sm:$0xf]
        %v290 = vld [vmem:[#allocation5 + $0x2c] sm:$0xf]
        %v291 = vld [vmem:[#allocation5 + $0x30] sm:$0xf]
        %v292 = vld [vmem:[#allocation5 + $0x34] sm:$0xf]
        %v293 = vld [vmem:[#allocation5 + $0x38] sm:$0xf]
        %v294 = vld [vmem:[#allocation5 + $0x3c] sm:$0xf]
        %v295 = vld [vmem:[%s2] sm:$0x1]
        %v297 = vlaneseq
        %v298 = vshrl.u32 %v297, 7
        %v299 = vsub.s32 0, %v298
        %v300 = vrot.slane %v295, %v299
        %v306 = vunpack.c.l.b16 %v275
        %v307 = vunpack.c.l.b16 %v276
        %v308 = vunpack.c.l.b16 %v277
        %v309 = vunpack.c.l.b16 %v278
        %v310 = vpack.c.b16 %v307, %v306
        %v311 = vpack.c.b16 %v309, %v308
        %v330 = vunpack.c.l.b16 %v279
        %v331 = vunpack.c.l.b16 %v280
        %v332 = vunpack.c.l.b16 %v281
        %v333 = vunpack.c.l.b16 %v282
        %v334 = vunpack.c.l.b16 %v283
        %v335 = vunpack.c.l.b16 %v284
        %v336 = vunpack.c.l.b16 %v285
        %v337 = vunpack.c.l.b16 %v286
        %v338 = vunpack.c.l.b16 %v287
        %v339 = vunpack.c.l.b16 %v288
        %v340 = vunpack.c.l.b16 %v289
        %v341 = vunpack.c.l.b16 %v290
        %v342 = vunpack.c.l.b16 %v291
        %v343 = vunpack.c.l.b16 %v292
        %v344 = vunpack.c.l.b16 %v293
        %v345 = vunpack.c.l.b16 %v294
        %v346 = vpack.c.b16 %v331, %v330
        %v347 = vpack.c.b16 %v333, %v332
        %v348 = vpack.c.b16 %v335, %v334
        %v349 = vpack.c.b16 %v337, %v336
        %v350 = vpack.c.b16 %v339, %v338
        %v351 = vpack.c.b16 %v341, %v340
        %v352 = vpack.c.b16 %v343, %v342
        %v353 = vpack.c.b16 %v345, %v344
        %362 = vmatprep.subr.bf16.mxu0 0
        %363 = vmatpush1.bf16.msra.mxu0 %v346
        %364 = vmatprep.subr.bf16.mxu0 0
        %365 = vmatpush1.bf16.msra.mxu0 %v347
        %366 = vmatprep.subr.bf16.mxu0 0
        %367 = vmatpush1.bf16.msra.mxu0 %v348
        %368 = vmatprep.subr.bf16.mxu0 0
        %369 = vmatpush1.bf16.msra.mxu0 %v349
        %370 = vmatprep.subr.bf16.mxu0 0
        %371 = vmatpush1.bf16.msra.mxu0 %v350
        %372 = vmatprep.subr.bf16.mxu0 0
        %373 = vmatpush1.bf16.msra.mxu0 %v351
        %374 = vmatprep.subr.bf16.mxu0 0
        %375 = vmatpush1.bf16.msra.mxu0 %v352
        %376 = vmatprep.subr.bf16.mxu0 0
        %377 = vmatpush1.bf16.msra.mxu0 %v353
        %378 = vmatprep.subr.bf16.mxu0 0
        %379 = vmatpush1.bf16.msra.mxu0 0
        %380 = vmatprep.subr.bf16.mxu0 0
        %381 = vmatpush1.bf16.msra.mxu0 0
        %382 = vmatprep.subr.bf16.mxu0 0
        %383 = vmatpush1.bf16.msra.mxu0 0
        %384 = vmatprep.subr.bf16.mxu0 0
        %385 = vmatpush1.bf16.msra.mxu0 0
        %386 = vmatprep.subr.bf16.mxu0 0
        %387 = vmatpush1.bf16.msra.mxu0 0
        %388 = vmatprep.subr.bf16.mxu0 0
        %389 = vmatpush1.bf16.msra.mxu0 0
        %390 = vmatprep.subr.bf16.mxu0 0
        %391 = vmatpush1.bf16.msra.mxu0 0
        %392 = vmatprep.subr.bf16.mxu0 0
        %393 = vmatpush1.bf16.msra.mxu0 0
        %394 = vmatprep.mubr.bf16.mxu0 0
        %395 = vmatmul.mubr.bf16.gmra.mrb[0].mxu0 %v310
        %v396 = vpop.f32.mrb[0].mxu0
        %v397 = vadd.f32 %v300, %v396
        %v398 = vpop.f32.mrb[0].mxu0
        %v399 = vpop.f32.mrb[0].mxu0
        %v400 = vadd.f32 %v300, %v399
        %v401 = vpop.f32.mrb[0].mxu0
        %402 = vmatprep.mubr.bf16.mxu0 0
        %403 = vmatmul.mubr.bf16.gmra.mrb[0].mxu0 %v311
        %v404 = vpop.f32.mrb[0].mxu0
        %v405 = vadd.f32 %v300, %v404
        %v406 = vpop.f32.mrb[0].mxu0
        %v407 = vpop.f32.mrb[0].mxu0
        %v408 = vadd.f32 %v300, %v407
        %v409 = vpop.f32.mrb[0].mxu0
        %410 = vdwg.mxu0
        %v411 = vsub.f32 0.0, %v397
        %v412 = vsub.f32 0.0, %v400
        %v413 = vsub.f32 0.0, %v405
        %v414 = vsub.f32 0.0, %v408
        %v415 = vmul.f32 %v411, 1.442695
        %v416 = vpow.pop %v415
        %v417 = vmul.f32 %v412, 1.442695
        %v418 = vpow.pop %v417
        %v419 = vmul.f32 %v413, 1.442695
        %v420 = vpow.pop %v419
        %v421 = vmul.f32 %v414, 1.442695
        %v422 = vpow.pop %v421
        %v423 = vadd.f32 %v416, 1.0
        %v424 = vadd.f32 %v418, 1.0
        %v425 = vadd.f32 %v420, 1.0
        %v426 = vadd.f32 %v422, 1.0
        %v427 = vrcp.pop %v423
        %v428 = vrcp.pop %v424
        %v429 = vrcp.pop %v425
        %v430 = vrcp.pop %v426
        %v431 = vpack.c.bf16 %v428, %v427
        %v432 = vpack.c.bf16 %v430, %v429
        %v433 = vld [vmem:[#allocation7] sm:$0xf]
        %v434 = vld [vmem:[#allocation7 + $0x4] sm:$0xf]
        %v435 = vld [vmem:[#allocation7 + $0x8] sm:$0xf]
        %v436 = vld [vmem:[#allocation7 + $0xc] sm:$0xf]
        %v437 = vld [vmem:[#allocation7 + $0x10] sm:$0xf]
        %v438 = vld [vmem:[#allocation7 + $0x14] sm:$0xf]
        %v439 = vld [vmem:[#allocation7 + $0x18] sm:$0xf]
        %v440 = vld [vmem:[#allocation7 + $0x1c] sm:$0xf]
        %v441 = vld [vmem:[#allocation7 + $0x20] sm:$0xf]
        %v442 = vld [vmem:[#allocation7 + $0x24] sm:$0xf]
        %v443 = vld [vmem:[#allocation7 + $0x28] sm:$0xf]
        %v444 = vld [vmem:[#allocation7 + $0x2c] sm:$0xf]
        %v445 = vld [vmem:[#allocation7 + $0x30] sm:$0xf]
        %v446 = vld [vmem:[#allocation7 + $0x34] sm:$0xf]
        %v447 = vld [vmem:[#allocation7 + $0x38] sm:$0xf]
        %v448 = vld [vmem:[#allocation7 + $0x3c] sm:$0xf]
        %v449 = vld [vmem:[%s4] sm:$0x1]
        %v451 = vlaneseq
        %v452 = vshrl.u32 %v451, 7
        %v453 = vsub.s32 0, %v452
        %v454 = vrot.slane %v449, %v453
        %v472 = vunpack.c.l.b16 %v433
        %v473 = vunpack.c.l.b16 %v434
        %v474 = vunpack.c.l.b16 %v435
        %v475 = vunpack.c.l.b16 %v436
        %v476 = vunpack.c.l.b16 %v437
        %v477 = vunpack.c.l.b16 %v438
        %v478 = vunpack.c.l.b16 %v439
        %v479 = vunpack.c.l.b16 %v440
        %v480 = vunpack.c.l.b16 %v441
        %v481 = vunpack.c.l.b16 %v442
        %v482 = vunpack.c.l.b16 %v443
        %v483 = vunpack.c.l.b16 %v444
        %v484 = vunpack.c.l.b16 %v445
        %v485 = vunpack.c.l.b16 %v446
        %v486 = vunpack.c.l.b16 %v447
        %v487 = vunpack.c.l.b16 %v448
        %v488 = vpack.c.b16 %v473, %v472
        %v489 = vpack.c.b16 %v475, %v474
        %v490 = vpack.c.b16 %v477, %v476
        %v491 = vpack.c.b16 %v479, %v478
        %v492 = vpack.c.b16 %v481, %v480
        %v493 = vpack.c.b16 %v483, %v482
        %v494 = vpack.c.b16 %v485, %v484
        %v495 = vpack.c.b16 %v487, %v486
        %504 = vmatprep.subr.bf16.mxu0 0
        %505 = vmatpush1.bf16.msra.mxu0 %v488
        %506 = vmatprep.subr.bf16.mxu0 0
        %507 = vmatpush1.bf16.msra.mxu0 %v489
        %508 = vmatprep.subr.bf16.mxu0 0
        %509 = vmatpush1.bf16.msra.mxu0 %v490
        %510 = vmatprep.subr.bf16.mxu0 0
        %511 = vmatpush1.bf16.msra.mxu0 %v491
        %512 = vmatprep.subr.bf16.mxu0 0
        %513 = vmatpush1.bf16.msra.mxu0 %v492
        %514 = vmatprep.subr.bf16.mxu0 0
        %515 = vmatpush1.bf16.msra.mxu0 %v493
        %516 = vmatprep.subr.bf16.mxu0 0
        %517 = vmatpush1.bf16.msra.mxu0 %v494
        %518 = vmatprep.subr.bf16.mxu0 0
        %519 = vmatpush1.bf16.msra.mxu0 %v495
        %520 = vmatprep.subr.bf16.mxu0 0
        %521 = vmatpush1.bf16.msra.mxu0 0
        %522 = vmatprep.subr.bf16.mxu0 0
        %523 = vmatpush1.bf16.msra.mxu0 0
        %524 = vmatprep.subr.bf16.mxu0 0
        %525 = vmatpush1.bf16.msra.mxu0 0
        %526 = vmatprep.subr.bf16.mxu0 0
        %527 = vmatpush1.bf16.msra.mxu0 0
        %528 = vmatprep.subr.bf16.mxu0 0
        %529 = vmatpush1.bf16.msra.mxu0 0
        %530 = vmatprep.subr.bf16.mxu0 0
        %531 = vmatpush1.bf16.msra.mxu0 0
        %532 = vmatprep.subr.bf16.mxu0 0
        %533 = vmatpush1.bf16.msra.mxu0 0
        %534 = vmatprep.subr.bf16.mxu0 0
        %535 = vmatpush1.bf16.msra.mxu0 0
        %536 = vmatprep.mubr.bf16.mxu0 0
        %537 = vmatmul.mubr.bf16.gmra.mrb[0].mxu0 %v431
        %v538 = vpop.f32.mrb[0].mxu0
        %v539 = vadd.f32 %v454, %v538
        %v540 = vpop.f32.mrb[0].mxu0
        %v541 = vpop.f32.mrb[0].mxu0
        %v542 = vadd.f32 %v454, %v541
        %v543 = vpop.f32.mrb[0].mxu0
        %544 = vmatprep.mubr.bf16.mxu0 0
        %545 = vmatmul.mubr.bf16.gmra.mrb[0].mxu0 %v432
        %v546 = vpop.f32.mrb[0].mxu0
        %v547 = vadd.f32 %v454, %v546
        %v548 = vpop.f32.mrb[0].mxu0
        %v549 = vpop.f32.mrb[0].mxu0
        %v550 = vadd.f32 %v454, %v549
        %v551 = vpop.f32.mrb[0].mxu0
        %552 = vdwg.mxu0
        %v553 = vsub.f32 0.0, %v539
        %v554 = vsub.f32 0.0, %v542
        %v555 = vsub.f32 0.0, %v547
        %v556 = vsub.f32 0.0, %v550
        %v557 = vmul.f32 %v553, 1.442695
        %v558 = vpow.pop %v557
        %v559 = vmul.f32 %v554, 1.442695
        %v560 = vpow.pop %v559
        %v561 = vmul.f32 %v555, 1.442695
        %v562 = vpow.pop %v561
        %v563 = vmul.f32 %v556, 1.442695
        %v564 = vpow.pop %v563
        %v565 = vadd.f32 %v558, 1.0
        %v566 = vadd.f32 %v560, 1.0
        %v567 = vadd.f32 %v562, 1.0
        %v568 = vadd.f32 %v564, 1.0
        %v569 = vrcp.pop %v565
        %v570 = vrcp.pop %v566
        %v571 = vrcp.pop %v567
        %v572 = vrcp.pop %v568
        %573 = vst [vmem:[%s271] sm:$0xff] %v569
        %574 = vst [vmem:[%s271 + $0x8] sm:$0xff] %v570
        %575 = vst [vmem:[%s271 + $0x10] sm:$0xff] %v571
        %576 = vst [vmem:[%s271 + $0x18] sm:$0xff] %v572
        %s577 = sand.u32 %s141, 1
        %s578 = scalar_lea.sflag [#allocation4], %s577
        %s579 = sand.u32 %s141, 1
        %s580 = smul.addr %s579, 32
        %s581 = scalar_lea.vmem [#allocation8], %s580
        // Predicated region
        $region53: #{tpu_custom_call.1} parent=39 // pred_check
          %p582 = pneg %p151
        $region54: #{tpu_custom_call.1} parent=39 // pred_check_branch
          %584 = sbr.rel (%p582) target = $region56
        $region55: #{tpu_custom_call.1} parent=39 // pred_region
          %s585 = smul.u32 4, %s23
          %s587 = ssub.s32 512, 512
          %588 = vsyncadd %s578, %s587
          %s589 = smul.addr %s585, 128
          %s590 = scalar_lea.hbm %s5, %s589
          %s591 = sshll.u32 %s581, 4
          %s592 = int_to_ptr.vmem [resolvable:$true] %s591
          %597 = dma.vmem_to_hbm [thread:$0]  %s592, 512, %s590, %s578, 128, 128, 8
        $region56: #{tpu_custom_call.1} parent=39 // pred_fallthru
          _
      $region40: #{tpu_custom_call.1} parent=5 // pred_fallthru
        _
      %p598 = scmp.le.s32.totalorder 2, %s18
      // Predicated region
      $region57: #{tpu_custom_call.1} parent=5 // pred_check
        %p599 = pneg %p598
      $region58: #{tpu_custom_call.1} parent=5 // pred_check_branch
        %601 = sbr.rel (%p599) target = $region60
      $region59: #{tpu_custom_call.1} parent=5 // pred_region
        %s602 = ssub.s32 %s18, 2
        // Predicated region
        $region61: #{tpu_custom_call.1} parent=59 // pred_check
          %p603 = pneg %p157
        $region62: #{tpu_custom_call.1} parent=59 // pred_check_branch
          %605 = sbr.rel (%p603) target = $region64
        $region63: #{tpu_custom_call.1} parent=59 // pred_region
          %s606 = sand.u32 %s142, 1
          %s607 = scalar_lea.sflag [#allocation4], %s606
          %s608 = sand.u32 %s142, 1
          %s609 = smul.addr %s608, 32
          %s610 = scalar_lea.vmem [#allocation8], %s609
          %611 = dma.done %s607, 512
        $region64: #{tpu_custom_call.1} parent=59 // pred_fallthru
          _
      $region60: #{tpu_custom_call.1} parent=5 // pred_fallthru
        _
    $region6: #{tpu_custom_call.1} parent=1 // loop_footer
      %s22 = sadd.s32 1, %s18
    $region7: #{tpu_custom_call.1} parent=1 // loop_footer_branch
      %17 = sbr.rel target = $region3
    $region8: #{tpu_custom_call.1} parent=1 // loop_exit
      _
    %612 = vsyncpa [#allocation3], 1
    %s613 = scalar_lea.sflag [#allocation3], 1
    %614 = vsyncpa %s613, 1
    %615 = vsyncpa [#allocation6], 1
    %616 = vsyncpa [#allocation4], 1
    %s617 = scalar_lea.sflag [#allocation4], 1
    %618 = vsyncpa %s617, 1

</llo_original>
